<compile_context>
chip_gen: v5e
topology: v5e:2x2
jax: 0.10.0
libtpu: 0.0.40
codegen_flags: <defaults>
</compile_context>

<pallas_src>
import functools

import jax
import jax.numpy as jnp
from jax.experimental import pallas as pl
from jax.experimental.pallas import tpu as pltpu

IN_FEATURES = 7
H1 = H2 = H3 = 30
LANE = 128      # lane width: head output is padded to a multiple of this
TB_MAX = 2048   # max batch tile (2048 * 512 B out tile << VMEM, overhead amortized)


def dqn_kernel(x_ref, w1_ref, b1_ref, w2_ref, b2_ref, w3_ref, b3_ref,
               wh_ref, bh_ref, o_ref):
    # fcb1: Linear(7, 30) + ReLU
    h = jnp.dot(x_ref[...], w1_ref[...], preferred_element_type=jnp.float32)
    h = jnp.maximum(h + b1_ref[...], 0.0)
    # fcb2: Linear(30, 30) + ReLU
    h = jnp.dot(h, w2_ref[...], preferred_element_type=jnp.float32)
    h = jnp.maximum(h + b2_ref[...], 0.0)
    # fcb3: Linear(30, 30) + ReLU
    h = jnp.dot(h, w3_ref[...], preferred_element_type=jnp.float32)
    h = jnp.maximum(h + b3_ref[...], 0.0)
    # head: Linear(30, action_num_padded).  h.view(B, -1) is a no-op: h is (TB, 30).
    out = jnp.dot(h, wh_ref[...], preferred_element_type=jnp.float32) + bh_ref[...]
    o_ref[...] = out.astype(o_ref.dtype)


def _round_up(n, m):
    return ((n + m - 1) // m) * m


@functools.partial(jax.jit, static_argnames=("action_num",))
def dqn_forward(x, params, action_num):
    B = x.shape[0]

    # --- batch tiling: biggest tile that makes sense, grid over the rest ---
    Bp = _round_up(max(B, 8), 8)            # sublane-aligned
    if Bp <= TB_MAX:
        TB = Bp
    else:
        TB = TB_MAX
        Bp = _round_up(Bp, TB)
    grid = (Bp // TB,)

    # --- lane-dense head: pad action_num up to a multiple of 128 lanes ---
    nout = _round_up(max(action_num, LANE), LANE)

    x_p = jnp.pad(x.astype(jnp.float32), ((0, Bp - B), (0, 0)))
    wh_p = jnp.pad(params["wh"], ((0, 0), (0, nout - action_num)))
    bh_p = jnp.pad(params["bh"], ((0, 0), (0, nout - action_num)))

    operands = (x_p,
                params["w1"], params["b1"],
                params["w2"], params["b2"],
                params["w3"], params["b3"],
                wh_p, bh_p)

    # Explicit specs (no late-binding lambdas).  x / out move per grid step;
    # weights & biases use constant index_maps so they stay resident in VMEM.
    in_specs = [
        pl.BlockSpec((TB, IN_FEATURES), lambda i: (i, 0)),   # x tile
        pl.BlockSpec((IN_FEATURES, H1), lambda i: (0, 0)),   # w1
        pl.BlockSpec((1, H1),           lambda i: (0, 0)),   # b1
        pl.BlockSpec((H1, H2),          lambda i: (0, 0)),   # w2
        pl.BlockSpec((1, H2),           lambda i: (0, 0)),   # b2
        pl.BlockSpec((H2, H3),          lambda i: (0, 0)),   # w3
        pl.BlockSpec((1, H3),           lambda i: (0, 0)),   # b3
        pl.BlockSpec((H3, nout),        lambda i: (0, 0)),   # wh (lane-padded)
        pl.BlockSpec((1, nout),         lambda i: (0, 0)),   # bh (lane-padded)
    ]
    out_spec = pl.BlockSpec((TB, nout), lambda i: (i, 0))

    flops = 2 * Bp * (IN_FEATURES * H1 + H1 * H2 + H2 * H3 + H3 * nout)
    weight_elems = (params["w1"].size + params["b1"].size +
                    params["w2"].size + params["b2"].size +
                    params["w3"].size + params["b3"].size +
                    wh_p.size + bh_p.size)
    bytes_accessed = 4 * (x_p.size + weight_elems + Bp * nout)

    out_padded = pl.pallas_call(
        dqn_kernel,
        out_shape=jax.ShapeDtypeStruct((Bp, nout), jnp.float32),
        grid=grid,
        in_specs=in_specs,
        out_specs=out_spec,
        compiler_params=pltpu.CompilerParams(
            dimension_semantics=("parallel",)),   # megacore sharding on v7x
        cost_estimate=pl.CostEstimate(
            flops=flops, transcendentals=0, bytes_accessed=bytes_accessed),
    )(*operands)

    return out_padded[:B, :action_num]


def init_params(key, action_num):
    """Deterministic init mirroring nn.Linear default (uniform +/- 1/sqrt(fan_in)).

    Weights are stored as (in_features, out_features), i.e. already transposed
    relative to PyTorch's (out, in), so the kernel does x @ W.
    """
    def linear(key, fan_in, fan_out):
        kw, kb = jax.random.split(key)
        bound = 1.0 / jnp.sqrt(float(fan_in))
        w = jax.random.uniform(kw, (fan_in, fan_out), jnp.float32, -bound, bound)
        b = jax.random.uniform(kb, (1, fan_out), jnp.float32, -bound, bound)
        return w, b

    k1, k2, k3, k4 = jax.random.split(key, 4)
    w1, b1 = linear(k1, IN_FEATURES, H1)
    w2, b2 = linear(k2, H1, H2)
    w3, b3 = linear(k3, H2, H3)
    wh, bh = linear(k4, H3, action_num)
    return {"w1": w1, "b1": b1, "w2": w2, "b2": b2,
            "w3": w3, "b3": b3, "wh": wh, "bh": bh}


def dqn_reference(x, params):
    h = jnp.maximum(x @ params["w1"] + params["b1"], 0.0)
    h = jnp.maximum(h @ params["w2"] + params["b2"], 0.0)
    h = jnp.maximum(h @ params["w3"] + params["b3"], 0.0)
    return h @ params["wh"] + params["bh"]


if __name__ == "__main__":
    key = jax.random.PRNGKey(0)
    k_params, k_x = jax.random.split(key)

    ACTION_NUM = 4
    BATCH = 8

    params = init_params(k_params, ACTION_NUM)
    x = jax.random.normal(k_x, (BATCH, IN_FEATURES), jnp.float32)

    out = dqn_forward(x, params, ACTION_NUM)
    out = jax.block_until_ready(out)

    ref = dqn_reference(x, params)
    assert out.shape == (BATCH, ACTION_NUM), out.shape
    assert jnp.allclose(out, ref, atol=1e-5, rtol=1e-5), "mismatch vs reference"

    # Also exercise the batched / multi-tile path (grid > 1) to make sure the
    # batch tiling, resident weights, and lane-dense output all compose.
    BIG_B = 4096 + 17   # non-multiple of the tile on purpose
    xb = jax.random.normal(jax.random.PRNGKey(1), (BIG_B, IN_FEATURES), jnp.float32)
    out_big = jax.block_until_ready(dqn_forward(xb, params, ACTION_NUM))
    ref_big = dqn_reference(xb, params)
    assert out_big.shape == (BIG_B, ACTION_NUM)
    assert jnp.allclose(out_big, ref_big, atol=1e-4, rtol=1e-4), "big-batch mismatch"

    print("KERNEL_OK")
</pallas_src>

<mosaic_0001>
module attributes {stable_mosaic.version = 11 : i64} {
  func.func @dqn_kernel(%arg0: i32, %arg1: memref<8x7xf32, #tpu.memory_space<vmem>>, %arg2: memref<7x30xf32, #tpu.memory_space<vmem>>, %arg3: memref<1x30xf32, #tpu.memory_space<vmem>>, %arg4: memref<30x30xf32, #tpu.memory_space<vmem>>, %arg5: memref<1x30xf32, #tpu.memory_space<vmem>>, %arg6: memref<30x30xf32, #tpu.memory_space<vmem>>, %arg7: memref<1x30xf32, #tpu.memory_space<vmem>>, %arg8: memref<30x128xf32, #tpu.memory_space<vmem>>, %arg9: memref<1x128xf32, #tpu.memory_space<vmem>>, %arg10: memref<8x128xf32, #tpu.memory_space<vmem>>) attributes {dimension_semantics = [#tpu.dimension_semantics<parallel>], iteration_bounds = array<i64: 1>, scalar_prefetch = 0 : i64, scratch_operands = 0 : i64, tpu.core_type = #tpu.core_type<tc>, window_params = [{transform_indices = @transform_0, window_bounds = array<i64: 8, 7>}, {pipeline_mode = #tpu.pipeline_mode<synchronous>, transform_indices = @transform_1, window_bounds = array<i64: 7, 30>}, {pipeline_mode = #tpu.pipeline_mode<synchronous>, transform_indices = @transform_2, window_bounds = array<i64: 1, 30>}, {pipeline_mode = #tpu.pipeline_mode<synchronous>, transform_indices = @transform_3, window_bounds = array<i64: 30, 30>}, {pipeline_mode = #tpu.pipeline_mode<synchronous>, transform_indices = @transform_4, window_bounds = array<i64: 1, 30>}, {pipeline_mode = #tpu.pipeline_mode<synchronous>, transform_indices = @transform_5, window_bounds = array<i64: 30, 30>}, {pipeline_mode = #tpu.pipeline_mode<synchronous>, transform_indices = @transform_6, window_bounds = array<i64: 1, 30>}, {pipeline_mode = #tpu.pipeline_mode<synchronous>, transform_indices = @transform_7, window_bounds = array<i64: 30, 128>}, {pipeline_mode = #tpu.pipeline_mode<synchronous>, transform_indices = @transform_8, window_bounds = array<i64: 1, 128>}, {transform_indices = @transform_9, window_bounds = array<i64: 8, 128>}]} {
    %c0 = arith.constant 0 : index
    %c0_0 = arith.constant 0 : index
    %0 = vector.load %arg1[%c0, %c0_0] : memref<8x7xf32, #tpu.memory_space<vmem>>, vector<8x7xf32>
    %c0_1 = arith.constant 0 : index
    %c0_2 = arith.constant 0 : index
    %1 = vector.load %arg2[%c0_1, %c0_2] : memref<7x30xf32, #tpu.memory_space<vmem>>, vector<7x30xf32>
    %cst = arith.constant dense<0.000000e+00> : vector<8x30xf32>
    %2 = tpu.matmul %0, %1, %cst {dimension_numbers = #tpu.dot_dimension_numbers<[1], [0], [0], [1], [0, 0, 1, 1], [], []>} : vector<8x7xf32>, vector<7x30xf32>, vector<8x30xf32> -> vector<8x30xf32>
    %c0_3 = arith.constant 0 : index
    %c0_4 = arith.constant 0 : index
    %3 = vector.load %arg3[%c0_3, %c0_4] : memref<1x30xf32, #tpu.memory_space<vmem>>, vector<1x30xf32>
    %4 = vector.broadcast %3 : vector<1x30xf32> to vector<8x30xf32>
    %5 = arith.addf %2, %4 : vector<8x30xf32>
    %cst_5 = arith.constant 0.000000e+00 : f32
    %6 = vector.broadcast %cst_5 : f32 to vector<8x30xf32>
    %7 = arith.maximumf %5, %6 : vector<8x30xf32>
    %c0_6 = arith.constant 0 : index
    %c0_7 = arith.constant 0 : index
    %8 = vector.load %arg4[%c0_6, %c0_7] : memref<30x30xf32, #tpu.memory_space<vmem>>, vector<30x30xf32>
    %cst_8 = arith.constant dense<0.000000e+00> : vector<8x30xf32>
    %9 = tpu.matmul %7, %8, %cst_8 {dimension_numbers = #tpu.dot_dimension_numbers<[1], [0], [0], [1], [0, 0, 1, 1], [], []>} : vector<8x30xf32>, vector<30x30xf32>, vector<8x30xf32> -> vector<8x30xf32>
    %c0_9 = arith.constant 0 : index
    %c0_10 = arith.constant 0 : index
    %10 = vector.load %arg5[%c0_9, %c0_10] : memref<1x30xf32, #tpu.memory_space<vmem>>, vector<1x30xf32>
    %11 = vector.broadcast %10 : vector<1x30xf32> to vector<8x30xf32>
    %12 = arith.addf %9, %11 : vector<8x30xf32>
    %cst_11 = arith.constant 0.000000e+00 : f32
    %13 = vector.broadcast %cst_11 : f32 to vector<8x30xf32>
    %14 = arith.maximumf %12, %13 : vector<8x30xf32>
    %c0_12 = arith.constant 0 : index
    %c0_13 = arith.constant 0 : index
    %15 = vector.load %arg6[%c0_12, %c0_13] : memref<30x30xf32, #tpu.memory_space<vmem>>, vector<30x30xf32>
    %cst_14 = arith.constant dense<0.000000e+00> : vector<8x30xf32>
    %16 = tpu.matmul %14, %15, %cst_14 {dimension_numbers = #tpu.dot_dimension_numbers<[1], [0], [0], [1], [0, 0, 1, 1], [], []>} : vector<8x30xf32>, vector<30x30xf32>, vector<8x30xf32> -> vector<8x30xf32>
    %c0_15 = arith.constant 0 : index
    %c0_16 = arith.constant 0 : index
    %17 = vector.load %arg7[%c0_15, %c0_16] : memref<1x30xf32, #tpu.memory_space<vmem>>, vector<1x30xf32>
    %18 = vector.broadcast %17 : vector<1x30xf32> to vector<8x30xf32>
    %19 = arith.addf %16, %18 : vector<8x30xf32>
    %cst_17 = arith.constant 0.000000e+00 : f32
    %20 = vector.broadcast %cst_17 : f32 to vector<8x30xf32>
    %21 = arith.maximumf %19, %20 : vector<8x30xf32>
    %c0_18 = arith.constant 0 : index
    %c0_19 = arith.constant 0 : index
    %22 = vector.load %arg8[%c0_18, %c0_19] : memref<30x128xf32, #tpu.memory_space<vmem>>, vector<30x128xf32>
    %cst_20 = arith.constant dense<0.000000e+00> : vector<8x128xf32>
    %23 = tpu.matmul %21, %22, %cst_20 {dimension_numbers = #tpu.dot_dimension_numbers<[1], [0], [0], [1], [0, 0, 1, 1], [], []>} : vector<8x30xf32>, vector<30x128xf32>, vector<8x128xf32> -> vector<8x128xf32>
    %c0_21 = arith.constant 0 : index
    %c0_22 = arith.constant 0 : index
    %24 = vector.load %arg9[%c0_21, %c0_22] : memref<1x128xf32, #tpu.memory_space<vmem>>, vector<1x128xf32>
    %25 = vector.broadcast %24 : vector<1x128xf32> to vector<8x128xf32>
    %26 = arith.addf %23, %25 : vector<8x128xf32>
    %c0_23 = arith.constant 0 : index
    %c0_24 = arith.constant 0 : index
    %27 = vector.load %arg10[%c0_23, %c0_24] : memref<8x128xf32, #tpu.memory_space<vmem>>, vector<8x128xf32>
    tpu.vector_store %arg10[%c0_23, %c0_24], %26 {strides = array<i32>} : memref<8x128xf32, #tpu.memory_space<vmem>>, vector<8x128xf32>,
    return
  }
  func.func @transform_0(%arg0: i32) -> (i32, i32) {
    %c0_i32 = arith.constant 0 : i32
    %c0_i32_0 = arith.constant 0 : i32
    return %arg0, %c0_i32 : i32, i32
  }
  func.func @transform_1(%arg0: i32) -> (i32, i32) {
    %c0_i32 = arith.constant 0 : i32
    %c0_i32_0 = arith.constant 0 : i32
    %c0_i32_1 = arith.constant 0 : i32
    return %c0_i32, %c0_i32_0 : i32, i32
  }
  func.func @transform_2(%arg0: i32) -> (i32, i32) {
    %c0_i32 = arith.constant 0 : i32
    %c0_i32_0 = arith.constant 0 : i32
    %c0_i32_1 = arith.constant 0 : i32
    return %c0_i32, %c0_i32_0 : i32, i32
  }
  func.func @transform_3(%arg0: i32) -> (i32, i32) {
    %c0_i32 = arith.constant 0 : i32
    %c0_i32_0 = arith.constant 0 : i32
    %c0_i32_1 = arith.constant 0 : i32
    return %c0_i32, %c0_i32_0 : i32, i32
  }
  func.func @transform_4(%arg0: i32) -> (i32, i32) {
    %c0_i32 = arith.constant 0 : i32
    %c0_i32_0 = arith.constant 0 : i32
    %c0_i32_1 = arith.constant 0 : i32
    return %c0_i32, %c0_i32_0 : i32, i32
  }
  func.func @transform_5(%arg0: i32) -> (i32, i32) {
    %c0_i32 = arith.constant 0 : i32
    %c0_i32_0 = arith.constant 0 : i32
    %c0_i32_1 = arith.constant 0 : i32
    return %c0_i32, %c0_i32_0 : i32, i32
  }
  func.func @transform_6(%arg0: i32) -> (i32, i32) {
    %c0_i32 = arith.constant 0 : i32
    %c0_i32_0 = arith.constant 0 : i32
    %c0_i32_1 = arith.constant 0 : i32
    return %c0_i32, %c0_i32_0 : i32, i32
  }
  func.func @transform_7(%arg0: i32) -> (i32, i32) {
    %c0_i32 = arith.constant 0 : i32
    %c0_i32_0 = arith.constant 0 : i32
    %c0_i32_1 = arith.constant 0 : i32
    return %c0_i32, %c0_i32_0 : i32, i32
  }
  func.func @transform_8(%arg0: i32) -> (i32, i32) {
    %c0_i32 = arith.constant 0 : i32
    %c0_i32_0 = arith.constant 0 : i32
    %c0_i32_1 = arith.constant 0 : i32
    return %c0_i32, %c0_i32_0 : i32, i32
  }
  func.func @transform_9(%arg0: i32) -> (i32, i32) {
    %c0_i32 = arith.constant 0 : i32
    %c0_i32_0 = arith.constant 0 : i32
    return %arg0, %c0_i32 : i32, i32
  }
}

</mosaic_0001>

<llo_original>
// kernel: dqn_forward.1
$region0: #{dqn_forward.1}
  #allocation0 [shape = 'u32[]', space=smem, size = 0x4, offset = 0x4, fixed_abs, tag = 'smem constant byte address 0x4 - core index']
  #allocation1 [shape = 'u32[72,128]{1,0:T(1,128)}', space=vmem, size = 0x9000, scoped, tag = 'internal scratch']
  %s0 = inlined_call_operand.vmem [shape: f32[8,7], index: 0, kind: input, shape index: {}]
  %s1 = inlined_call_operand.vmem [shape: f32[7,30], index: 1, kind: input, shape index: {}]
  %s2 = inlined_call_operand.vmem [shape: f32[1,30], index: 2, kind: input, shape index: {}]
  %s3 = inlined_call_operand.vmem [shape: f32[30,30], index: 3, kind: input, shape index: {}]
  %s4 = inlined_call_operand.vmem [shape: f32[1,30], index: 4, kind: input, shape index: {}]
  %s5 = inlined_call_operand.vmem [shape: f32[30,30], index: 5, kind: input, shape index: {}]
  %s6 = inlined_call_operand.vmem [shape: f32[1,30], index: 6, kind: input, shape index: {}]
  %s7 = inlined_call_operand.vmem [shape: f32[30,128], index: 7, kind: input, shape index: {}]
  %s8 = inlined_call_operand.vmem [shape: f32[1,128], index: 8, kind: input, shape index: {}]
  %s9 = inlined_call_operand.vmem [shape: f32[8,128], index: 9, kind: output, shape index: {}]
  %s10 = sld [smem:[#allocation0]]
  $region46: #{dqn_forward.1} parent=0
    _
  %s12 = ssub.s32 1, %s10
  %s13 = scalar_select 0, %s12, %s10
  // Predicated region
  $region2: #{dqn_forward.1} parent=0 // pred_check
    _
  $region3: #{dqn_forward.1} parent=0 // pred_check_branch
    %15 = sbr.rel (0) target = $region5
  $region4: #{dqn_forward.1} parent=0 // pred_region
    _
  $region5: #{dqn_forward.1} parent=0 // pred_fallthru
    _
  // Predicated region
  $region6: #{dqn_forward.1} parent=0 // pred_check
    _
  $region7: #{dqn_forward.1} parent=0 // pred_check_branch
    %17 = sbr.rel (0) target = $region9
  $region8: #{dqn_forward.1} parent=0 // pred_region
    _
  $region9: #{dqn_forward.1} parent=0 // pred_fallthru
    _
  // Predicated region
  $region10: #{dqn_forward.1} parent=0 // pred_check
    _
  $region11: #{dqn_forward.1} parent=0 // pred_check_branch
    %19 = sbr.rel (0) target = $region13
  $region12: #{dqn_forward.1} parent=0 // pred_region
    _
  $region13: #{dqn_forward.1} parent=0 // pred_fallthru
    _
  // Predicated region
  $region14: #{dqn_forward.1} parent=0 // pred_check
    _
  $region15: #{dqn_forward.1} parent=0 // pred_check_branch
    %21 = sbr.rel (0) target = $region17
  $region16: #{dqn_forward.1} parent=0 // pred_region
    _
  $region17: #{dqn_forward.1} parent=0 // pred_fallthru
    _
  // Predicated region
  $region18: #{dqn_forward.1} parent=0 // pred_check
    _
  $region19: #{dqn_forward.1} parent=0 // pred_check_branch
    %23 = sbr.rel (0) target = $region21
  $region20: #{dqn_forward.1} parent=0 // pred_region
    _
  $region21: #{dqn_forward.1} parent=0 // pred_fallthru
    _
  // Predicated region
  $region22: #{dqn_forward.1} parent=0 // pred_check
    _
  $region23: #{dqn_forward.1} parent=0 // pred_check_branch
    %25 = sbr.rel (0) target = $region25
  $region24: #{dqn_forward.1} parent=0 // pred_region
    _
  $region25: #{dqn_forward.1} parent=0 // pred_fallthru
    _
  // Predicated region
  $region26: #{dqn_forward.1} parent=0 // pred_check
    _
  $region27: #{dqn_forward.1} parent=0 // pred_check_branch
    %27 = sbr.rel (0) target = $region29
  $region28: #{dqn_forward.1} parent=0 // pred_region
    _
  $region29: #{dqn_forward.1} parent=0 // pred_fallthru
    _
  // Predicated region
  $region30: #{dqn_forward.1} parent=0 // pred_check
    _
  $region31: #{dqn_forward.1} parent=0 // pred_check_branch
    %29 = sbr.rel (0) target = $region33
  $region32: #{dqn_forward.1} parent=0 // pred_region
    _
  $region33: #{dqn_forward.1} parent=0 // pred_fallthru
    _
  // Predicated region
  $region34: #{dqn_forward.1} parent=0 // pred_check
    _
  $region35: #{dqn_forward.1} parent=0 // pred_check_branch
    %31 = sbr.rel (0) target = $region37
  $region36: #{dqn_forward.1} parent=0 // pred_region
    _
  $region37: #{dqn_forward.1} parent=0 // pred_fallthru
    _
  %v32 = vld [vmem:[%s0] sm:$0xff]
  %v33 = vld [vmem:[%s1] sm:$0x7f]
  %v34 = vld [vmem:[%s2] sm:$0x1]
  %v36 = vperm.slane %v34, 0
  %vm38 = vcmask 56320
  %v40 = vsel %vm38, %v32, 0
  %vm42 = vcmask 1046528
  %v44 = vsel %vm42, %v33, 0
  %46 = vmatpush.msra.mxu0 0.0
  %47 = vmatpush.msra.mxu0 0.0
  %48 = vmatpush.msra.mxu0 0.0
  %49 = vmatpush.msra.mxu0 0.0
  %50 = vmatpush.msra.mxu0 0.0
  %51 = vmatpush.msra.mxu0 0.0
  %52 = vmatpush.msra.mxu0 0.0
  %53 = vmatpush.msra.mxu0 0.0
  %54 = vmatpush.msra.mxu0 0.0
  %55 = vmatpush.msra.mxu0 0.0
  %56 = vmatpush.msra.mxu0 0.0
  %57 = vmatpush.msra.mxu0 0.0
  %58 = vmatpush.msra.mxu0 0.0
  %59 = vmatpush.msra.mxu0 0.0
  %60 = vmatpush.msra.mxu0 0.0
  %61 = vmatpush.msra.mxu0 %v44
  %62 = vmatmul.f32.gmra.mxu0 %v40
  %v63 = vpop.f32.mrf.mxu0
  %v64 = vadd.f32 %v36, %v63
  %65 = vdwg.mxu0
  %v66 = vmax.f32 %v64, 0.0
  %v67 = vld [vmem:[%s3] sm:$0xff]
  %v68 = vld [vmem:[%s3 + $0x8] sm:$0xff]
  %v69 = vld [vmem:[%s3 + $0x10] sm:$0xff]
  %v70 = vld [vmem:[%s3 + $0x18] sm:$0x3f]
  %v71 = vld [vmem:[%s4] sm:$0x1]
  %v73 = vperm.slane %v71, 0
  %vm75 = vcmask 244736
  %v77 = vsel %vm75, %v66, 0
  %vm79 = vcmask 1045504
  %v81 = vsel %vm79, %v70, 0
  %83 = vmatpush.msra.mxu0 0.0
  %84 = vmatpush.msra.mxu0 0.0
  %85 = vmatpush.msra.mxu0 0.0
  %86 = vmatpush.msra.mxu0 0.0
  %87 = vmatpush.msra.mxu0 0.0
  %88 = vmatpush.msra.mxu0 0.0
  %89 = vmatpush.msra.mxu0 0.0
  %90 = vmatpush.msra.mxu0 0.0
  %91 = vmatpush.msra.mxu0 0.0
  %92 = vmatpush.msra.mxu0 0.0
  %93 = vmatpush.msra.mxu0 0.0
  %94 = vmatpush.msra.mxu0 0.0
  %95 = vmatpush.msra.mxu0 %v81
  %96 = vmatpush.msra.mxu0 %v69
  %97 = vmatpush.msra.mxu0 %v68
  %98 = vmatpush.msra.mxu0 %v67
  %99 = vmatmul.f32.gmra.mxu0 %v77
  %v100 = vpop.f32.mrf.mxu0
  %v101 = vadd.f32 %v73, %v100
  %102 = vdwg.mxu0
  %v103 = vmax.f32 %v101, 0.0
  %v104 = vld [vmem:[%s5] sm:$0xff]
  %v105 = vld [vmem:[%s5 + $0x8] sm:$0xff]
  %v106 = vld [vmem:[%s5 + $0x10] sm:$0xff]
  %v107 = vld [vmem:[%s5 + $0x18] sm:$0x3f]
  %v108 = vld [vmem:[%s6] sm:$0x1]
  %v110 = vperm.slane %v108, 0
  %v113 = vsel %vm75, %v103, 0
  %v116 = vsel %vm79, %v107, 0
  %118 = vmatpush.msra.mxu0 0.0
  %119 = vmatpush.msra.mxu0 0.0
  %120 = vmatpush.msra.mxu0 0.0
  %121 = vmatpush.msra.mxu0 0.0
  %122 = vmatpush.msra.mxu0 0.0
  %123 = vmatpush.msra.mxu0 0.0
  %124 = vmatpush.msra.mxu0 0.0
  %125 = vmatpush.msra.mxu0 0.0
  %126 = vmatpush.msra.mxu0 0.0
  %127 = vmatpush.msra.mxu0 0.0
  %128 = vmatpush.msra.mxu0 0.0
  %129 = vmatpush.msra.mxu0 0.0
  %130 = vmatpush.msra.mxu0 %v116
  %131 = vmatpush.msra.mxu0 %v106
  %132 = vmatpush.msra.mxu0 %v105
  %133 = vmatpush.msra.mxu0 %v104
  %134 = vmatmul.f32.gmra.mxu0 %v113
  %v135 = vpop.f32.mrf.mxu0
  %v136 = vadd.f32 %v110, %v135
  %137 = vdwg.mxu0
  %v138 = vmax.f32 %v136, 0.0
  %v139 = vld [vmem:[%s7] sm:$0xff]
  %v140 = vld [vmem:[%s7 + $0x8] sm:$0xff]
  %v141 = vld [vmem:[%s7 + $0x10] sm:$0xff]
  %v142 = vld [vmem:[%s7 + $0x18] sm:$0x3f]
  %v143 = vld [vmem:[%s8] sm:$0x1]
  %v145 = vperm.slane %v143, 0
  %v148 = vsel %vm75, %v138, 0
  %v151 = vsel %vm79, %v142, 0
  %153 = vmatpush.msra.mxu0 0.0
  %154 = vmatpush.msra.mxu0 0.0
  %155 = vmatpush.msra.mxu0 0.0
  %156 = vmatpush.msra.mxu0 0.0
  %157 = vmatpush.msra.mxu0 0.0
  %158 = vmatpush.msra.mxu0 0.0
  %159 = vmatpush.msra.mxu0 0.0
  %160 = vmatpush.msra.mxu0 0.0
  %161 = vmatpush.msra.mxu0 0.0
  %162 = vmatpush.msra.mxu0 0.0
  %163 = vmatpush.msra.mxu0 0.0
  %164 = vmatpush.msra.mxu0 0.0
  %165 = vmatpush.msra.mxu0 %v151
  %166 = vmatpush.msra.mxu0 %v141
  %167 = vmatpush.msra.mxu0 %v140
  %168 = vmatpush.msra.mxu0 %v139
  %169 = vmatmul.f32.gmra.mxu0 %v148
  %v170 = vpop.f32.mrf.mxu0
  %v171 = vadd.f32 %v145, %v170
  %172 = vdwg.mxu0
  %173 = vst [vmem:[%s9] sm:$0xff] %v171
  // Predicated region
  $region38: #{dqn_forward.1} parent=0 // pred_check
    _
  $region39: #{dqn_forward.1} parent=0 // pred_check_branch
    %175 = sbr.rel (0) target = $region41
  $region40: #{dqn_forward.1} parent=0 // pred_region
    _
  $region41: #{dqn_forward.1} parent=0 // pred_fallthru
    _
  // Predicated region
  $region42: #{dqn_forward.1} parent=0 // pred_check
    _
  $region43: #{dqn_forward.1} parent=0 // pred_check_branch
    %177 = sbr.rel (0) target = $region45
  $region44: #{dqn_forward.1} parent=0 // pred_region
    _
  $region45: #{dqn_forward.1} parent=0 // pred_fallthru
    _

</llo_original>
